<compile_context>
chip_gen: v7x
topology: tpu7x:2x2x1
jax: 0.10.0
libtpu: 0.0.40
codegen_flags: <defaults>
</compile_context>

<pallas_src>
import functools

import jax
import jax.numpy as jnp
from jax.experimental import pallas as pl
from jax.experimental.pallas import tpu as pltpu


def _round_up(x, m):
    return ((x + m - 1) // m) * m


def _nbytes(shape, dtype):
    n = 1
    for d in shape:
        n *= int(d)
    return n * jnp.dtype(dtype).itemsize


# ----------------------------------------------------------------------------
# Shared tiled matmul + bias kernel (used for the patch embedding and fc head)
# ----------------------------------------------------------------------------
def _matmul_bias_kernel(x_ref, w_ref, b_ref, o_ref):
    o_ref[...] = (
        jnp.dot(x_ref[...], w_ref[...], preferred_element_type=jnp.float32)
        + b_ref[...]
    ).astype(o_ref.dtype)


def _matmul_bias(x, w, b, *, tm=512, tn=512, out_dtype=jnp.float32):
    M, K = x.shape
    N = w.shape[1]
    tm = M if M <= tm else tm
    tn = N if N <= tn else tn
    grid = (pl.cdiv(M, tm), pl.cdiv(N, tn))
    return pl.pallas_call(
        _matmul_bias_kernel,
        out_shape=jax.ShapeDtypeStruct((M, N), out_dtype),
        grid=grid,
        in_specs=[
            pl.BlockSpec((tm, K), lambda i, j: (i, 0)),
            pl.BlockSpec((K, tn), lambda i, j: (0, j)),
            pl.BlockSpec((1, tn), lambda i, j: (0, j)),
        ],
        out_specs=pl.BlockSpec((tm, tn), lambda i, j: (i, j)),
        compiler_params=pltpu.CompilerParams(
            dimension_semantics=("parallel", "parallel")),
    )(x, w, b)


# ----------------------------------------------------------------------------
# Encoder: patch-embedding conv == row-tiled bf16 matmul over im2col'd patches
# ----------------------------------------------------------------------------
def encoder_forward(imgs, conv_wT, conv_b, patch, row_tile=1024):
    """imgs: (B, 3, H, W) NCHW -> features (B, T, Ep) f32, Ep = roundup(E, 128)."""
    B, C, H, W = imgs.shape
    gh, gw = H // patch, W // patch
    E = conv_wT.shape[1]
    K = C * patch * patch
    rows = B * gh * gw

    Kp = _round_up(K, 128)
    Ep = _round_up(E, 128)

    # im2col (glue, plain JAX) fused with the bf16 downcast: (B*T, Kp) bf16
    patches = imgs.reshape(B, C, gh, patch, gw, patch)
    patches = jnp.transpose(patches, (0, 2, 4, 1, 3, 5)).reshape(rows, K)
    patches = jnp.pad(patches, ((0, 0), (0, Kp - K))).astype(jnp.bfloat16)

    w = jnp.pad(conv_wT, ((0, Kp - K), (0, Ep - E))).astype(jnp.bfloat16)
    b = jnp.pad(conv_b, ((0, 0), (0, Ep - E)))  # padded channels stay exactly 0

    out = _matmul_bias(patches, w, b, tm=row_tile, tn=512)
    return out.reshape(B, gh * gw, Ep)


# ----------------------------------------------------------------------------
# Decoder recurrence kernel: one grid step == one timestep.
#   grid = (batch_tiles ["parallel"], S ["arbitrary"])
#   h/c and the hoisted attention keys live in VMEM scratch; per-step h_t and
#   alpha are streamed out lane-dense; the fc head runs afterwards as a single
#   batched matmul.
# ----------------------------------------------------------------------------
def _decoder_kernel(
    feats_ref, embed_ref,
    u_wT_ref, u_b_ref, w_wT_ref, w_b_ref, a_w_ref, a_b_ref,
    init_wT_ref, init_b_ref,
    we_ref, wc_ref, wh_ref, bg_ref,
    hs_ref, alphas_ref,
    h_scr, c_scr, uas_scr,
    *, decoder_dim, fused_gates,
):
    D = decoder_dim
    feats = feats_ref[...]                         # (Bt, T, Ep) f32
    Bt, T, Ep = feats.shape
    A = u_wT_ref.shape[-1]

    # ---- step 0: init_hidden_state (one fused (Ep,2D) matmul) + hoisted keys ----
    @pl.when(pl.program_id(1) == 0)
    def _init():
        mean_f = jnp.mean(feats, axis=1)           # (Bt, Ep)
        hc = (jnp.dot(mean_f.astype(init_wT_ref.dtype), init_wT_ref[...],
                      preferred_element_type=jnp.float32)
              + init_b_ref[...])                   # (Bt, 2D)
        h_scr[...] = hc[:, :D]
        c_scr[...] = hc[:, D:]
        u = jnp.dot(feats.reshape(Bt * T, Ep).astype(u_wT_ref.dtype),
                    u_wT_ref[...], preferred_element_type=jnp.float32)
        uas_scr[...] = u.reshape(Bt, T, A) + u_b_ref[...]

    h = h_scr[...]                                 # (Bt, D) f32
    c = c_scr[...]

    # ---- Attention (Bahdanau) ----
    w_as = (jnp.dot(h.astype(w_wT_ref.dtype), w_wT_ref[...],
                    preferred_element_type=jnp.float32)
            + w_b_ref[...])                        # (Bt, A)
    combined = jnp.tanh(uas_scr[...] + w_as[:, None, :])           # (Bt, T, A)
    # score head: VPU multiply + lane reduce (no N=1 MXU matmul)
    score = jnp.sum(combined * a_w_ref[...], axis=-1) + a_b_ref[...]  # (Bt, T)
    score = score - jnp.max(score, axis=-1, keepdims=True)
    exp_s = jnp.exp(score)
    alpha = exp_s / jnp.sum(exp_s, axis=-1, keepdims=True)         # exact softmax
    # context: VPU broadcast-multiply + cross-sublane reduce (MXU left for gates)
    context = jnp.sum(feats * alpha[:, :, None], axis=1)           # (Bt, Ep) f32

    # ---- LSTMCell (PyTorch gate order i, f, g, o), concat-free ----
    embed_s = embed_ref[0]                         # (Bt, embed) bf16
    ctx_lo = context.astype(wc_ref.dtype)
    h_lo = h.astype(wh_ref.dtype)
    if fused_gates:
        # 3 fused matmuls -> (Bt, 4D); lane-aligned gate slices (D % 128 == 0)
        gates = (jnp.dot(embed_s, we_ref[...], preferred_element_type=jnp.float32)
                 + jnp.dot(ctx_lo, wc_ref[...], preferred_element_type=jnp.float32)
                 + jnp.dot(h_lo, wh_ref[...], preferred_element_type=jnp.float32)
                 + bg_ref[...])
        gi = gates[:, 0 * D:1 * D]
        gf = gates[:, 1 * D:2 * D]
        gg = gates[:, 2 * D:3 * D]
        go = gates[:, 3 * D:4 * D]
    else:
        # D < 128: keep aligned per-gate (4, in, D) stacks (no sub-128 lane slicing)
        gs = []
        for g in range(4):
            gs.append(
                jnp.dot(embed_s, we_ref[g], preferred_element_type=jnp.float32)
                + jnp.dot(ctx_lo, wc_ref[g], preferred_element_type=jnp.float32)
                + jnp.dot(h_lo, wh_ref[g], preferred_element_type=jnp.float32)
                + bg_ref[g])
        gi, gf, gg, go = gs
    i_g = jax.nn.sigmoid(gi)
    f_g = jax.nn.sigmoid(gf)
    g_g = jnp.tanh(gg)
    o_g = jax.nn.sigmoid(go)
    c_new = f_g * c + i_g * g_g
    h_new = o_g * jnp.tanh(c_new)
    h_scr[...] = h_new
    c_scr[...] = c_new

    # ---- lane-dense streamed per-step outputs (fc head applied after the loop) ----
    Dp = hs_ref.shape[-1]
    Tp = alphas_ref.shape[-1]
    h_out = h_new
    if Dp != D:
        h_out = jnp.concatenate(
            [h_new, jnp.zeros((Bt, Dp - D), h_new.dtype)], axis=-1)
    hs_ref[0] = h_out.astype(hs_ref.dtype)
    a_out = alpha
    if Tp != T:
        a_out = jnp.concatenate(
            [alpha, jnp.zeros((Bt, Tp - T), alpha.dtype)], axis=-1)
    alphas_ref[0] = a_out


def decoder_forward(features, captions, params):
    """features: (B, T, Ef) f32 (Ef lane-padded ok), captions: (B, L) int32."""
    B, T, Ef = features.shape
    S = captions.shape[1] - 1
    D = params["init_h_wT"].shape[1]
    V = params["fcn1_wT"].shape[1]
    A = params["U_wT"].shape[1]
    embed_dim = params["embedding"].shape[1]
    bf16 = jnp.bfloat16

    def pad_rows(w):  # pad E-row weights up to the (possibly padded) feature dim
        return jnp.pad(w, ((0, Ef - w.shape[0]), (0, 0))) if w.shape[0] != Ef else w

    # embedding lookup (glue) in bf16 + timestep-major layout: (S, B, embed)
    embed = params["embedding"].astype(bf16)[captions[:, :S]]
    embed_seq = jnp.transpose(embed, (1, 0, 2))

    # pad batch to a sublane multiple (padded rows discarded at the end)
    Bp = max(8, _round_up(B, 8))
    if Bp != B:
        features = jnp.pad(features, ((0, Bp - B), (0, 0), (0, 0)))
        embed_seq = jnp.pad(embed_seq, ((0, 0), (0, Bp - B), (0, 0)))

    # megacore (v7x): split padded batch across the two TensorCores when possible
    nb = 2 if Bp % 16 == 0 else 1
    Bt = Bp // nb

    # lane-dense padded output widths
    Dp = _round_up(D, 128)
    Tp = _round_up(T, 128)
    Vp = _round_up(V, 128)

    # attention / init weights (bf16 matrices, f32 biases)
    u_wT = pad_rows(params["U_wT"]).astype(bf16)
    u_b = params["U_b"]
    w_wT = params["W_wT"].astype(bf16)
    w_b = params["W_b"]
    a_w = params["A_wT"].T                         # (1, A) f32 (VPU use)
    a_b = params["A_b"]
    init_wT = jnp.concatenate(
        [pad_rows(params["init_h_wT"]), pad_rows(params["init_c_wT"])],
        axis=1).astype(bf16)                       # (Ef, 2D)
    init_b = jnp.concatenate([params["init_h_b"], params["init_c_b"]], axis=1)

    # LSTM gate weights: concat-free split (embed | context); fused when aligned
    wih_T = params["lstm_wih_T"]                   # (embed+E, 4D)
    we = wih_T[:embed_dim]
    wc = pad_rows(wih_T[embed_dim:])
    wh = params["lstm_whh_T"]
    bg = params["lstm_bih"] + params["lstm_bhh"]
    fused_gates = (D % 128 == 0)
    if fused_gates:
        we_in, wc_in, wh_in = we.astype(bf16), wc.astype(bf16), wh.astype(bf16)
        bg_in = bg                                 # (1, 4D)
    else:
        def per_gate(w):                           # (in, 4D) -> (4, in, D)
            return jnp.transpose(w.reshape(w.shape[0], 4, D), (1, 0, 2))
        we_in = per_gate(we).astype(bf16)
        wc_in = per_gate(wc).astype(bf16)
        wh_in = per_gate(wh).astype(bf16)
        bg_in = jnp.transpose(bg.reshape(1, 4, D), (1, 0, 2))   # (4, 1, D)

    weight_inputs = (u_wT, u_b, w_wT, w_b, a_w, a_b, init_wT, init_b,
                     we_in, wc_in, wh_in, bg_in)
    inputs = (features, embed_seq) + weight_inputs

    def const_spec(x):
        nd = x.ndim
        return pl.BlockSpec(x.shape, lambda b, s, nd=nd: (0,) * nd)

    in_specs = [
        pl.BlockSpec((Bt, T, Ef), lambda b, s: (b, 0, 0)),           # features
        pl.BlockSpec((1, Bt, embed_dim), lambda b, s: (s, b, 0)),    # per-step embed
    ] + [const_spec(x) for x in weight_inputs]

    out_specs = [
        pl.BlockSpec((1, Bt, Dp), lambda b, s: (s, b, 0)),           # h_t stream
        pl.BlockSpec((1, Bt, Tp), lambda b, s: (s, b, 0)),           # alpha stream
    ]
    out_shape = (
        jax.ShapeDtypeStruct((S, Bp, Dp), jnp.bfloat16),
        jax.ShapeDtypeStruct((S, Bp, Tp), jnp.float32),
    )
    scratch_shapes = [
        pltpu.VMEM((Bt, D), jnp.float32),          # h carry
        pltpu.VMEM((Bt, D), jnp.float32),          # c carry
        pltpu.VMEM((Bt, T, A), jnp.float32),       # hoisted attention keys
    ]

    # explicit scoped-VMEM limit sized from actual block residency (+ headroom)
    vmem_bytes = (
        2 * _nbytes((Bt, T, Ef), features.dtype)
        + 2 * _nbytes((1, Bt, embed_dim), embed_seq.dtype)
        + sum(2 * _nbytes(x.shape, x.dtype) for x in weight_inputs)
        + 2 * _nbytes((1, Bt, Dp), jnp.bfloat16)
        + 2 * _nbytes((1, Bt, Tp), jnp.float32)
        + 2 * _nbytes((Bt, D), jnp.float32)
        + _nbytes((Bt, T, A), jnp.float32))
    vmem_limit = int(min(max(int(vmem_bytes * 1.5) + (4 << 20), 32 << 20),
                         128 << 20))

    kernel = functools.partial(_decoder_kernel, decoder_dim=D,
                               fused_gates=fused_gates)
    hs, alphas_p = pl.pallas_call(
        kernel,
        out_shape=out_shape,
        grid=(nb, S),
        in_specs=in_specs,
        out_specs=out_specs,
        scratch_shapes=scratch_shapes,
        compiler_params=pltpu.CompilerParams(
            dimension_semantics=("parallel", "arbitrary"),
            vmem_limit_bytes=vmem_limit),
    )(*inputs)

    # fc head moved out of the recurrence: one batched lane-dense matmul over
    # all (step, batch) rows.  Dropout == identity (eval mode).
    fc_wT = jnp.pad(params["fcn1_wT"], ((0, Dp - D), (0, Vp - V))).astype(bf16)
    fc_b = jnp.pad(params["fcn1_b"], ((0, 0), (0, Vp - V)))
    preds_flat = _matmul_bias(hs.reshape(S * Bp, Dp), fc_wT, fc_b, tm=512, tn=512)

    preds = jnp.transpose(preds_flat.reshape(S, Bp, Vp)[:, :B, :V], (1, 0, 2))
    alphas = jnp.transpose(alphas_p[:, :B, :T], (1, 0, 2))
    return preds, alphas


def encoder_decoder_forward(imgs, captions, params, patch):
    features = encoder_forward(imgs, params["conv_wT"], params["conv_b"], patch)
    return decoder_forward(features, captions, params)


# ----------------------------------------------------------------------------
# Deterministic parameter construction + example run
# ----------------------------------------------------------------------------
def make_params(key, *, embed_size, vocab_size, attention_dim, encoder_dim,
                decoder_dim, in_patch_dim):
    ks = jax.random.split(key, 16)
    n = lambda k, shp, s=0.1: (s * jax.random.normal(k, shp)).astype(jnp.float32)
    lstm_in = encoder_dim + embed_size
    return {
        # encoder "conv" (patch embedding), stored transposed for x @ W
        "conv_wT": n(ks[0], (in_patch_dim, encoder_dim)),
        "conv_b": n(ks[1], (1, encoder_dim)),
        # embedding table
        "embedding": n(ks[2], (vocab_size, embed_size)),
        # attention
        "U_wT": n(ks[3], (encoder_dim, attention_dim)),
        "U_b": n(ks[4], (1, attention_dim)),
        "W_wT": n(ks[5], (decoder_dim, attention_dim)),
        "W_b": n(ks[6], (1, attention_dim)),
        "A_wT": n(ks[7], (attention_dim, 1)),
        "A_b": n(ks[8], (1, 1)),
        # init_h / init_c
        "init_h_wT": n(ks[9], (encoder_dim, decoder_dim)),
        "init_h_b": n(ks[10], (1, decoder_dim)),
        "init_c_wT": n(ks[11], (encoder_dim, decoder_dim)),
        "init_c_b": n(ks[12], (1, decoder_dim)),
        # LSTMCell (PyTorch: weight_ih (4D, in), weight_hh (4D, D)); stored transposed
        "lstm_wih_T": n(ks[13], (lstm_in, 4 * decoder_dim)),
        "lstm_bih": n(ks[14], (1, 4 * decoder_dim)),
        "lstm_whh_T": n(ks[15], (decoder_dim, 4 * decoder_dim)),
        "lstm_bhh": jnp.zeros((1, 4 * decoder_dim), jnp.float32),
        # fcn1
        "fcn1_wT": n(jax.random.fold_in(key, 99), (decoder_dim, vocab_size)),
        "fcn1_b": jnp.zeros((1, vocab_size), jnp.float32),
    }


if __name__ == "__main__":
    key = jax.random.PRNGKey(0)

    # small, shape-consistent config
    B = 2
    H = W = 32
    patch = 8                 # -> T = (32/8)^2 = 16 feature "timesteps"
    embed_size = 32
    vocab_size = 128
    attention_dim = 32
    encoder_dim = 64
    decoder_dim = 32
    cap_len = 9               # -> seq_length = 8

    params = make_params(
        key,
        embed_size=embed_size, vocab_size=vocab_size,
        attention_dim=attention_dim, encoder_dim=encoder_dim,
        decoder_dim=decoder_dim, in_patch_dim=3 * patch * patch,
    )

    k_img, k_cap = jax.random.split(jax.random.fold_in(key, 7))
    imgs = jax.random.normal(k_img, (B, 3, H, W), jnp.float32)       # NCHW
    captions = jax.random.randint(k_cap, (B, cap_len), 0, vocab_size, jnp.int32)

    preds, alphas = encoder_decoder_forward(imgs, captions, params, patch)
    jax.block_until_ready((preds, alphas))

    assert preds.shape == (B, cap_len - 1, vocab_size), preds.shape
    assert alphas.shape == (B, cap_len - 1, (H // patch) * (W // patch)), alphas.shape
    print("KERNEL_OK")
</pallas_src>

<mosaic_0001>
module attributes {stable_mosaic.version = 11 : i64} {
  func.func @_matmul_bias_kernel(%arg0: i32, %arg1: i32, %arg2: memref<32x256xbf16, #tpu.memory_space<vmem>>, %arg3: memref<256x128xbf16, #tpu.memory_space<vmem>>, %arg4: memref<1x128xf32, #tpu.memory_space<vmem>>, %arg5: memref<32x128xf32, #tpu.memory_space<vmem>>) attributes {dimension_semantics = [#tpu.dimension_semantics<parallel>, #tpu.dimension_semantics<parallel>], iteration_bounds = array<i64: 1, 1>, scalar_prefetch = 0 : i64, scratch_operands = 0 : i64, tpu.core_type = #tpu.core_type<tc>, window_params = [{transform_indices = @transform_0, window_bounds = array<i64: 32, 256>}, {transform_indices = @transform_1, window_bounds = array<i64: 256, 128>}, {transform_indices = @transform_2, window_bounds = array<i64: 1, 128>}, {transform_indices = @transform_3, window_bounds = array<i64: 32, 128>}]} {
    %c0 = arith.constant 0 : index
    %c0_0 = arith.constant 0 : index
    %0 = vector.load %arg2[%c0, %c0_0] : memref<32x256xbf16, #tpu.memory_space<vmem>>, vector<32x256xbf16>
    %c0_1 = arith.constant 0 : index
    %c0_2 = arith.constant 0 : index
    %1 = vector.load %arg3[%c0_1, %c0_2] : memref<256x128xbf16, #tpu.memory_space<vmem>>, vector<256x128xbf16>
    %cst = arith.constant dense<0.000000e+00> : vector<32x128xf32>
    %2 = tpu.matmul %0, %1, %cst {dimension_numbers = #tpu.dot_dimension_numbers<[1], [0], [0], [1], [0, 0, 1, 1], [], []>} : vector<32x256xbf16>, vector<256x128xbf16>, vector<32x128xf32> -> vector<32x128xf32>
    %c0_3 = arith.constant 0 : index
    %c0_4 = arith.constant 0 : index
    %3 = vector.load %arg4[%c0_3, %c0_4] : memref<1x128xf32, #tpu.memory_space<vmem>>, vector<1x128xf32>
    %4 = vector.broadcast %3 : vector<1x128xf32> to vector<32x128xf32>
    %5 = arith.addf %2, %4 : vector<32x128xf32>
    %c0_5 = arith.constant 0 : index
    %c0_6 = arith.constant 0 : index
    %6 = vector.load %arg5[%c0_5, %c0_6] : memref<32x128xf32, #tpu.memory_space<vmem>>, vector<32x128xf32>
    tpu.vector_store %arg5[%c0_5, %c0_6], %5 {strides = array<i32>} : memref<32x128xf32, #tpu.memory_space<vmem>>, vector<32x128xf32>,
    return
  }
  func.func @transform_0(%arg0: i32, %arg1: i32) -> (i32, i32) {
    %c0_i32 = arith.constant 0 : i32
    %c0_i32_0 = arith.constant 0 : i32
    return %arg0, %c0_i32 : i32, i32
  }
  func.func @transform_1(%arg0: i32, %arg1: i32) -> (i32, i32) {
    %c0_i32 = arith.constant 0 : i32
    %c0_i32_0 = arith.constant 0 : i32
    return %c0_i32, %arg1 : i32, i32
  }
  func.func @transform_2(%arg0: i32, %arg1: i32) -> (i32, i32) {
    %c0_i32 = arith.constant 0 : i32
    %c0_i32_0 = arith.constant 0 : i32
    return %c0_i32, %arg1 : i32, i32
  }
  func.func @transform_3(%arg0: i32, %arg1: i32) -> (i32, i32) {
    %c0_i32 = arith.constant 0 : i32
    return %arg0, %arg1 : i32, i32
  }
}

</mosaic_0001>

<llo_original>
// kernel: tpu_custom_call.1
$region0: #{tpu_custom_call.1}
  #allocation0 [shape = 'u32[]', space=smem, size = 0x4, offset = 0x4, fixed_abs, tag = 'smem constant byte address 0x4 - core index']
  #allocation1 [shape = 'u32[144,128]{1,0:T(1,128)}', space=vmem, size = 0x12000, scoped, tag = 'internal scratch']
  %s0 = inlined_call_operand.hbm [shape: bf16[32,256], index: 0, kind: input, shape index: {}]
  %s1 = inlined_call_operand.hbm [shape: bf16[256,128], index: 1, kind: input, shape index: {}]
  %s2 = inlined_call_operand.vmem [shape: f32[1,128], index: 2, kind: input, shape index: {}]
  %s3 = inlined_call_operand.hbm [shape: f32[32,128], index: 3, kind: output, shape index: {}]
  %s4 = sld [smem:[#allocation0]]
  $region30: #{tpu_custom_call.1} parent=0
    _
  %s6 = ssub.s32 1, %s4
  %s7 = scalar_select 0, %s6, %s4
  $region1: #{tpu_custom_call.1} parent=0
    #allocation2 [shape = 'u8[16384]{0}', space=vmem, size = 0x4000, scoped, tag = 'input window, operand 0, single buffered']
    #allocation3 [shape = 's32[1]{0}', space=sflag, size = 0x4, scoped, tag = 'scoped memory for tpu_custom_call.1']
    #allocation4 [shape = 's32[1]{0}', space=sflag, size = 0x4, scoped, tag = 'scoped memory for tpu_custom_call.1']
    #allocation5 [shape = 'u8[65536]{0}', space=vmem, size = 0x10000, scoped, tag = 'input window, operand 1, single buffered']
    #allocation6 [shape = 's32[1]{0}', space=sflag, size = 0x4, scoped, tag = 'scoped memory for tpu_custom_call.1']
    #allocation7 [shape = 'u8[16384]{0}', space=vmem, size = 0x4000, scoped, tag = 'output window, operand 0, single buffered']
    %8 = vsyncpa [#allocation3], 0
    %9 = vsyncpa [#allocation6], 0
    %10 = vsyncpa [#allocation4], 0
    // Predicated region
    $region2: #{tpu_custom_call.1} parent=1 // pred_check
      _
    $region3: #{tpu_custom_call.1} parent=1 // pred_check_branch
      %12 = sbr.rel (0) target = $region5
    $region4: #{tpu_custom_call.1} parent=1 // pred_region
      %s14 = ssub.s32 512, 512
      %15 = vsyncadd [#allocation3], %s14
      %s16 = sshll.u32 [#allocation2], 4
      %s17 = int_to_ptr.vmem [resolvable:$true] %s16
      %22 = dma.hbm_to_vmem [thread:$0]  %s0, 512, %s17, [#allocation3], 128, 128, 8
    $region5: #{tpu_custom_call.1} parent=1 // pred_fallthru
      _
    // Predicated region
    $region6: #{tpu_custom_call.1} parent=1 // pred_check
      _
    $region7: #{tpu_custom_call.1} parent=1 // pred_check_branch
      %24 = sbr.rel (0) target = $region9
    $region8: #{tpu_custom_call.1} parent=1 // pred_region
      %s26 = ssub.s32 2048, 2048
      %27 = vsyncadd [#allocation6], %s26
      %s28 = sshll.u32 [#allocation5], 4
      %s29 = int_to_ptr.vmem [resolvable:$true] %s28
      %34 = dma.hbm_to_vmem [thread:$0]  %s1, 2048, %s29, [#allocation6], 64, 64, 4
    $region9: #{tpu_custom_call.1} parent=1 // pred_fallthru
      _
    // Predicated region
    $region10: #{tpu_custom_call.1} parent=1 // pred_check
      _
    $region11: #{tpu_custom_call.1} parent=1 // pred_check_branch
      %36 = sbr.rel (0) target = $region13
    $region12: #{tpu_custom_call.1} parent=1 // pred_region
      _
    $region13: #{tpu_custom_call.1} parent=1 // pred_fallthru
      _
    // Predicated region
    $region14: #{tpu_custom_call.1} parent=1 // pred_check
      _
    $region15: #{tpu_custom_call.1} parent=1 // pred_check_branch
      %38 = sbr.rel (0) target = $region17
    $region16: #{tpu_custom_call.1} parent=1 // pred_region
      %39 = dma.done [#allocation3], 512
    $region17: #{tpu_custom_call.1} parent=1 // pred_fallthru
      _
    // Predicated region
    $region18: #{tpu_custom_call.1} parent=1 // pred_check
      _
    $region19: #{tpu_custom_call.1} parent=1 // pred_check_branch
      %41 = sbr.rel (0) target = $region21
    $region20: #{tpu_custom_call.1} parent=1 // pred_region
      %42 = dma.done [#allocation6], 2048
    $region21: #{tpu_custom_call.1} parent=1 // pred_fallthru
      _
    %v44 = vld [vmem:[#allocation2] sm:$0xff]
    %v45 = vld [vmem:[#allocation2 + $0x8] sm:$0xff]
    %v46 = vld [vmem:[#allocation2 + $0x10] sm:$0xff]
    %v47 = vld [vmem:[#allocation2 + $0x18] sm:$0xff]
    %v48 = vld [vmem:[#allocation5] sm:$0xf]
    %v49 = vld [vmem:[#allocation5 + $0x4] sm:$0xf]
    %v50 = vld [vmem:[#allocation5 + $0x8] sm:$0xf]
    %v51 = vld [vmem:[#allocation5 + $0xc] sm:$0xf]
    %v52 = vld [vmem:[#allocation5 + $0x10] sm:$0xf]
    %v53 = vld [vmem:[#allocation5 + $0x14] sm:$0xf]
    %v54 = vld [vmem:[#allocation5 + $0x18] sm:$0xf]
    %v55 = vld [vmem:[#allocation5 + $0x1c] sm:$0xf]
    %v56 = vld [vmem:[#allocation5 + $0x20] sm:$0xf]
    %v57 = vld [vmem:[#allocation5 + $0x24] sm:$0xf]
    %v58 = vld [vmem:[#allocation5 + $0x28] sm:$0xf]
    %v59 = vld [vmem:[#allocation5 + $0x2c] sm:$0xf]
    %v60 = vld [vmem:[#allocation5 + $0x30] sm:$0xf]
    %v61 = vld [vmem:[#allocation5 + $0x34] sm:$0xf]
    %v62 = vld [vmem:[#allocation5 + $0x38] sm:$0xf]
    %v63 = vld [vmem:[#allocation5 + $0x3c] sm:$0xf]
    %v64 = vld [vmem:[#allocation5 + $0x40] sm:$0xf]
    %v65 = vld [vmem:[#allocation5 + $0x44] sm:$0xf]
    %v66 = vld [vmem:[#allocation5 + $0x48] sm:$0xf]
    %v67 = vld [vmem:[#allocation5 + $0x4c] sm:$0xf]
    %v68 = vld [vmem:[#allocation5 + $0x50] sm:$0xf]
    %v69 = vld [vmem:[#allocation5 + $0x54] sm:$0xf]
    %v70 = vld [vmem:[#allocation5 + $0x58] sm:$0xf]
    %v71 = vld [vmem:[#allocation5 + $0x5c] sm:$0xf]
    %v72 = vld [vmem:[#allocation5 + $0x60] sm:$0xf]
    %v73 = vld [vmem:[#allocation5 + $0x64] sm:$0xf]
    %v74 = vld [vmem:[#allocation5 + $0x68] sm:$0xf]
    %v75 = vld [vmem:[#allocation5 + $0x6c] sm:$0xf]
    %v76 = vld [vmem:[#allocation5 + $0x70] sm:$0xf]
    %v77 = vld [vmem:[#allocation5 + $0x74] sm:$0xf]
    %v78 = vld [vmem:[#allocation5 + $0x78] sm:$0xf]
    %v79 = vld [vmem:[#allocation5 + $0x7c] sm:$0xf]
    %v80 = vld [vmem:[%s2] sm:$0x1]
    %v82 = vlaneseq
    %v83 = vshrl.u32 %v82, 7
    %v84 = vsub.s32 0, %v83
    %v85 = vrot.slane %v80, %v84
    %v91 = vunpack.c.l.b16 %v44
    %v92 = vunpack.c.h.b16 %v44
    %v93 = vunpack.c.l.b16 %v45
    %v94 = vunpack.c.h.b16 %v45
    %v95 = vunpack.c.l.b16 %v46
    %v96 = vunpack.c.h.b16 %v46
    %v97 = vunpack.c.l.b16 %v47
    %v98 = vunpack.c.h.b16 %v47
    %v99 = vpack.c.b16 %v93, %v91
    %v100 = vpack.c.b16 %v94, %v92
    %v101 = vpack.c.b16 %v97, %v95
    %v102 = vpack.c.b16 %v98, %v96
    %v139 = vunpack.c.l.b16 %v48
    %v140 = vunpack.c.l.b16 %v49
    %v141 = vunpack.c.l.b16 %v50
    %v142 = vunpack.c.l.b16 %v51
    %v143 = vunpack.c.l.b16 %v52
    %v144 = vunpack.c.l.b16 %v53
    %v145 = vunpack.c.l.b16 %v54
    %v146 = vunpack.c.l.b16 %v55
    %v147 = vunpack.c.l.b16 %v56
    %v148 = vunpack.c.l.b16 %v57
    %v149 = vunpack.c.l.b16 %v58
    %v150 = vunpack.c.l.b16 %v59
    %v151 = vunpack.c.l.b16 %v60
    %v152 = vunpack.c.l.b16 %v61
    %v153 = vunpack.c.l.b16 %v62
    %v154 = vunpack.c.l.b16 %v63
    %v155 = vunpack.c.l.b16 %v64
    %v156 = vunpack.c.l.b16 %v65
    %v157 = vunpack.c.l.b16 %v66
    %v158 = vunpack.c.l.b16 %v67
    %v159 = vunpack.c.l.b16 %v68
    %v160 = vunpack.c.l.b16 %v69
    %v161 = vunpack.c.l.b16 %v70
    %v162 = vunpack.c.l.b16 %v71
    %v163 = vunpack.c.l.b16 %v72
    %v164 = vunpack.c.l.b16 %v73
    %v165 = vunpack.c.l.b16 %v74
    %v166 = vunpack.c.l.b16 %v75
    %v167 = vunpack.c.l.b16 %v76
    %v168 = vunpack.c.l.b16 %v77
    %v169 = vunpack.c.l.b16 %v78
    %v170 = vunpack.c.l.b16 %v79
    %v171 = vpack.c.b16 %v140, %v139
    %v172 = vpack.c.b16 %v142, %v141
    %v173 = vpack.c.b16 %v144, %v143
    %v174 = vpack.c.b16 %v146, %v145
    %v175 = vpack.c.b16 %v148, %v147
    %v176 = vpack.c.b16 %v150, %v149
    %v177 = vpack.c.b16 %v152, %v151
    %v178 = vpack.c.b16 %v154, %v153
    %v179 = vpack.c.b16 %v156, %v155
    %v180 = vpack.c.b16 %v158, %v157
    %v181 = vpack.c.b16 %v160, %v159
    %v182 = vpack.c.b16 %v162, %v161
    %v183 = vpack.c.b16 %v164, %v163
    %v184 = vpack.c.b16 %v166, %v165
    %v185 = vpack.c.b16 %v168, %v167
    %v186 = vpack.c.b16 %v170, %v169
    %203 = vmatprep.subr.bf16.mxu0 0
    %204 = vmatpush1.bf16.msra.mxu0 %v171
    %205 = vmatprep.subr.bf16.mxu0 0
    %206 = vmatpush1.bf16.msra.mxu0 %v172
    %207 = vmatprep.subr.bf16.mxu0 0
    %208 = vmatpush1.bf16.msra.mxu0 %v173
    %209 = vmatprep.subr.bf16.mxu0 0
    %210 = vmatpush1.bf16.msra.mxu0 %v174
    %211 = vmatprep.subr.bf16.mxu0 0
    %212 = vmatpush1.bf16.msra.mxu0 %v175
    %213 = vmatprep.subr.bf16.mxu0 0
    %214 = vmatpush1.bf16.msra.mxu0 %v176
    %215 = vmatprep.subr.bf16.mxu0 0
    %216 = vmatpush1.bf16.msra.mxu0 %v177
    %217 = vmatprep.subr.bf16.mxu0 0
    %218 = vmatpush1.bf16.msra.mxu0 %v178
    %219 = vmatprep.subr.bf16.mxu0 0
    %220 = vmatpush1.bf16.msra.mxu0 %v179
    %221 = vmatprep.subr.bf16.mxu0 0
    %222 = vmatpush1.bf16.msra.mxu0 %v180
    %223 = vmatprep.subr.bf16.mxu0 0
    %224 = vmatpush1.bf16.msra.mxu0 %v181
    %225 = vmatprep.subr.bf16.mxu0 0
    %226 = vmatpush1.bf16.msra.mxu0 %v182
    %227 = vmatprep.subr.bf16.mxu0 0
    %228 = vmatpush1.bf16.msra.mxu0 %v183
    %229 = vmatprep.subr.bf16.mxu0 0
    %230 = vmatpush1.bf16.msra.mxu0 %v184
    %231 = vmatprep.subr.bf16.mxu0 0
    %232 = vmatpush1.bf16.msra.mxu0 %v185
    %233 = vmatprep.subr.bf16.mxu0 0
    %234 = vmatpush1.bf16.msra.mxu0 %v186
    %235 = vmatprep.mubr.bf16.mxu0 %v100
    %236 = vmatmul.mubr.bf16.gmra.mrb[0].mxu0 %v99
    %v237 = vpop.f32.mrb[0].mxu0
    %v238 = vadd.f32 %v85, %v237
    %v239 = vpop.f32.mrb[0].mxu0
    %v240 = vpop.f32.mrb[0].mxu0
    %v241 = vadd.f32 %v85, %v240
    %v242 = vpop.f32.mrb[0].mxu0
    %243 = vmatprep.mubr.bf16.mxu0 %v102
    %244 = vmatmul.mubr.bf16.gmra.mrb[0].mxu0 %v101
    %v245 = vpop.f32.mrb[0].mxu0
    %v246 = vadd.f32 %v85, %v245
    %v247 = vpop.f32.mrb[0].mxu0
    %v248 = vpop.f32.mrb[0].mxu0
    %v249 = vadd.f32 %v85, %v248
    %v250 = vpop.f32.mrb[0].mxu0
    %251 = vdwg.mxu0
    %252 = vst [vmem:[#allocation7] sm:$0xff] %v238
    %253 = vst [vmem:[#allocation7 + $0x8] sm:$0xff] %v241
    %254 = vst [vmem:[#allocation7 + $0x10] sm:$0xff] %v246
    %255 = vst [vmem:[#allocation7 + $0x18] sm:$0xff] %v249
    // Predicated region
    $region22: #{tpu_custom_call.1} parent=1 // pred_check
      _
    $region23: #{tpu_custom_call.1} parent=1 // pred_check_branch
      %257 = sbr.rel (0) target = $region25
    $region24: #{tpu_custom_call.1} parent=1 // pred_region
      %s259 = ssub.s32 512, 512
      %260 = vsyncadd [#allocation4], %s259
      %s261 = sshll.u32 [#allocation7], 4
      %s262 = int_to_ptr.vmem [resolvable:$true] %s261
      %267 = dma.vmem_to_hbm [thread:$0]  %s262, 512, %s3, [#allocation4], 128, 128, 8
    $region25: #{tpu_custom_call.1} parent=1 // pred_fallthru
      _
    // Predicated region
    $region26: #{tpu_custom_call.1} parent=1 // pred_check
      _
    $region27: #{tpu_custom_call.1} parent=1 // pred_check_branch
      %269 = sbr.rel (0) target = $region29
    $region28: #{tpu_custom_call.1} parent=1 // pred_region
      %270 = dma.done [#allocation4], 512
    $region29: #{tpu_custom_call.1} parent=1 // pred_fallthru
      _
    %271 = vsyncpa [#allocation3], 1
    %272 = vsyncpa [#allocation6], 1
    %273 = vsyncpa [#allocation4], 1

</llo_original>
